<compile_context>
chip_gen: v7x
topology: tpu7x:2x2x1
jax: 0.10.0
libtpu: 0.0.40
codegen_flags: <defaults>
</compile_context>

<pallas_src>
import jax
import jax.numpy as jnp
from jax import lax
from jax.experimental import pallas as pl
from jax.experimental.pallas import tpu as pltpu


def nmt_kernel(src_ref, dec_ref, len_ref,               # (B*S,F), (B*T,F), (B,1,1) i32
               w_enc_ref, b_enc_ref,                    # (F,H), (1,H)
               w_dec_ref, b_dec_ref,                    # (F,H), (1,H)
               w_cat_ref, b_out_ref,                    # (2H,H) = [W_ctx; W_q], (1,H)
               dec_out_ref, attn_ref):                  # (T, B*H), (T, B*S)
    f32 = jnp.float32
    B = len_ref.shape[0]
    H = w_enc_ref.shape[1]
    S = src_ref.shape[0] // B
    T = dec_ref.shape[0] // B

    lens = len_ref[...]                                 # (B,1,1) int32

    # ---------------- encoder: memory bank (one MXU call, M = B*S) ----------------
    mem2 = jnp.tanh(jnp.dot(src_ref[...], w_enc_ref[...],
                            preferred_element_type=f32) + b_enc_ref[...])   # (B*S, H)
    mem3 = mem2.reshape(B, S, H)                        # free: S % 8 == 0 (tile aligned)

    # ---------------- decoder pre-activation (one MXU call, M = B*T) ---------------
    qpre = jnp.dot(dec_ref[...], w_dec_ref[...],
                   preferred_element_type=f32) + b_dec_ref[...]             # (B*T, H)

    # -------- length-masked mean over src (decoder init_state), folded into q ------
    # exact VPU math (mask/L weights + sublane reduce); static unroll over batch.
    pos_s = lax.broadcasted_iota(jnp.int32, (S, 1), 0)                      # (S, 1)
    q_parts = []
    for b in range(B):
        l_b = lens[b]                                                       # (1, 1) i32
        inv_b = 1.0 / jnp.maximum(l_b, 1).astype(f32)                       # (1, 1) f32
        w_b = jnp.where(pos_s < l_b, inv_b, 0.0)                            # (S, 1)
        enc_b = jnp.sum(mem3[b] * w_b, axis=0, keepdims=True)               # (1, H)
        q_parts.append(jnp.tanh(qpre[b * T:(b + 1) * T, :] + enc_b))        # (T, H)
    q2 = jnp.concatenate(q_parts, axis=0)                                   # (B*T, H)
    q3 = q2.reshape(B, T, H)                            # free: T % 8 == 0

    # ---------------- attention: batched (flash-style) einsums ---------------------
    scores = jnp.einsum('bth,bsh->bts', q3, mem3,
                        preferred_element_type=f32)                         # (B, T, S)
    pos3 = lax.broadcasted_iota(jnp.int32, (B, T, S), 2)
    scores = jnp.where(pos3 < lens, scores, f32(-1e30))                     # length mask

    m = jnp.max(scores, axis=-1, keepdims=True)
    e = jnp.exp(scores - m)
    # approx=True would move the divide to the EUP; kept exact to preserve tolerance.
    attn3 = e * pl.reciprocal(jnp.sum(e, axis=-1, keepdims=True), approx=False)

    ctx3 = jnp.einsum('bts,bsh->bth', attn3, mem3,
                      preferred_element_type=f32)                           # (B, T, H)

    # ---------------- fused output projection: [ctx, q] @ [W_ctx; W_q] -------------
    cat = jnp.concatenate([ctx3.reshape(B * T, H), q2], axis=-1)            # (B*T, 2H)
    out2 = jnp.tanh(jnp.dot(cat, w_cat_ref[...],
                            preferred_element_type=f32) + b_out_ref[...])   # (B*T, H)

    # ---------------- lane-packed stores (wrapper reshape is free) -----------------
    attn2 = attn3.reshape(B * T, S)                     # free: T % 8 == 0
    for b in range(B):
        dec_out_ref[:, b * H:(b + 1) * H] = out2[b * T:(b + 1) * T, :].astype(dec_out_ref.dtype)
        attn_ref[:, b * S:(b + 1) * S] = attn2[b * T:(b + 1) * T, :].astype(attn_ref.dtype)


def nmt_forward(src, tgt, lengths, params):
    """src (S,B,F) f32, tgt (Ttot,B,F) f32, lengths (B,) int."""
    dec_in = tgt[:-1]                                   # (T, B, F), T = Ttot - 1
    S, B, F = src.shape
    T = dec_in.shape[0]
    H = params["w_enc"].shape[1]

    # batch-major row order for the single fused kernel invocation.
    src2 = jnp.transpose(src, (1, 0, 2)).reshape(B * S, F)       # rows = b*S + s
    dec2 = jnp.transpose(dec_in, (1, 0, 2)).reshape(B * T, F)    # rows = b*T + t
    lens3 = lengths.astype(jnp.int32).reshape(B, 1, 1)
    # one-time fused output-projection weight (would be pre-fused in a real model).
    w_cat = jnp.concatenate([params["w_ctx"], params["w_q"]], axis=0)       # (2H, H)

    vmem = pltpu.MemorySpace.VMEM
    dec_out_packed, attn_packed = pl.pallas_call(
        nmt_kernel,
        out_shape=(
            jax.ShapeDtypeStruct((T, B * H), jnp.float32),       # dec_out, lane-packed
            jax.ShapeDtypeStruct((T, B * S), jnp.float32),       # attn,   lane-packed
        ),
        in_specs=[pl.BlockSpec(memory_space=vmem) for _ in range(9)],
        out_specs=(pl.BlockSpec(memory_space=vmem),
                   pl.BlockSpec(memory_space=vmem)),
    )(src2, dec2, lens3,
      params["w_enc"], params["b_enc"], params["w_dec"], params["b_dec"],
      w_cat, params["b_out"])

    dec_out = dec_out_packed.reshape(T, B, H)           # free row-major reshape
    attns = {"std": attn_packed.reshape(T, B, S)}       # free row-major reshape
    return dec_out, attns


def nmt_forward_ref(src, tgt, lengths, params):
    """Pure-JAX reference for correctness checking."""
    dec_in = tgt[:-1]
    S, B, F = src.shape
    mem = jnp.tanh(jnp.einsum("sbf,fh->sbh", src, params["w_enc"]) + params["b_enc"])
    mask_s = (jnp.arange(S)[:, None] < lengths[None, :]).astype(jnp.float32)   # (S,B)
    denom = jnp.maximum(lengths, 1).astype(jnp.float32)
    enc_state = jnp.sum(mem * mask_s[:, :, None], axis=0) / denom[:, None]     # (B,H)
    q = jnp.tanh(jnp.einsum("tbf,fh->tbh", dec_in, params["w_dec"])
                 + params["b_dec"] + enc_state[None, :, :])
    scores = jnp.einsum("tbh,sbh->tbs", q, mem)
    smask = (jnp.arange(S)[None, None, :] < lengths[None, :, None])
    scores = jnp.where(smask, scores, -1e30)
    attn = jax.nn.softmax(scores, axis=-1)
    ctx = jnp.einsum("tbs,sbh->tbh", attn, mem)
    dec_out = jnp.tanh(jnp.einsum("tbh,hk->tbk", ctx, params["w_ctx"])
                       + jnp.einsum("tbh,hk->tbk", q, params["w_q"])
                       + params["b_out"])
    return dec_out, {"std": attn}


if __name__ == "__main__":
    S, B, F, H = 8, 2, 16, 32
    TGT_LEN = 9                                         # dec_in length = 8

    key = jax.random.PRNGKey(0)
    ks = jax.random.split(key, 8)
    params = {
        "w_enc": jax.random.normal(ks[0], (F, H), jnp.float32) * 0.1,
        "b_enc": jax.random.normal(ks[1], (1, H), jnp.float32) * 0.1,
        "w_dec": jax.random.normal(ks[2], (F, H), jnp.float32) * 0.1,
        "b_dec": jax.random.normal(ks[3], (1, H), jnp.float32) * 0.1,
        "w_ctx": jax.random.normal(ks[4], (H, H), jnp.float32) * 0.1,
        "w_q": jax.random.normal(ks[5], (H, H), jnp.float32) * 0.1,
        "b_out": jax.random.normal(ks[6], (1, H), jnp.float32) * 0.1,
    }
    dk = jax.random.split(ks[7], 2)
    src = jax.random.normal(dk[0], (S, B, F), jnp.float32)
    tgt = jax.random.normal(dk[1], (TGT_LEN, B, F), jnp.float32)
    lengths = jnp.array([8, 5], jnp.int32)

    dec_out, attns = nmt_forward(src, tgt, lengths, params)
    dec_out = jax.block_until_ready(dec_out)
    attn = jax.block_until_ready(attns["std"])

    dec_out_r, attns_r = nmt_forward_ref(src, tgt, lengths, params)
    assert dec_out.shape == (TGT_LEN - 1, B, H)
    assert attn.shape == (TGT_LEN - 1, B, S)
    assert jnp.allclose(dec_out, dec_out_r, atol=5e-4, rtol=5e-4)
    assert jnp.allclose(attn, attns_r["std"], atol=5e-4, rtol=5e-4)

    print("KERNEL_OK")
</pallas_src>

<mosaic_0001>
module attributes {stable_mosaic.version = 11 : i64} {
  func.func @nmt_kernel(%arg0: memref<16x16xf32, #tpu.memory_space<vmem>>, %arg1: memref<16x16xf32, #tpu.memory_space<vmem>>, %arg2: memref<2x1x1xi32, #tpu.memory_space<vmem>>, %arg3: memref<16x32xf32, #tpu.memory_space<vmem>>, %arg4: memref<1x32xf32, #tpu.memory_space<vmem>>, %arg5: memref<16x32xf32, #tpu.memory_space<vmem>>, %arg6: memref<1x32xf32, #tpu.memory_space<vmem>>, %arg7: memref<64x32xf32, #tpu.memory_space<vmem>>, %arg8: memref<1x32xf32, #tpu.memory_space<vmem>>, %arg9: memref<8x64xf32, #tpu.memory_space<vmem>>, %arg10: memref<8x16xf32, #tpu.memory_space<vmem>>) attributes {dimension_semantics = [], scalar_prefetch = 0 : i64, scratch_operands = 0 : i64, tpu.core_type = #tpu.core_type<tc>} {
    %c0 = arith.constant 0 : index
    %c0_0 = arith.constant 0 : index
    %c0_1 = arith.constant 0 : index
    %0 = vector.load %arg2[%c0, %c0_0, %c0_1] : memref<2x1x1xi32, #tpu.memory_space<vmem>>, vector<2x1x1xi32>
    %c0_2 = arith.constant 0 : index
    %c0_3 = arith.constant 0 : index
    %1 = vector.load %arg0[%c0_2, %c0_3] : memref<16x16xf32, #tpu.memory_space<vmem>>, vector<16x16xf32>
    %c0_4 = arith.constant 0 : index
    %c0_5 = arith.constant 0 : index
    %2 = vector.load %arg3[%c0_4, %c0_5] : memref<16x32xf32, #tpu.memory_space<vmem>>, vector<16x32xf32>
    %cst = arith.constant dense<0.000000e+00> : vector<16x32xf32>
    %3 = tpu.matmul %1, %2, %cst {dimension_numbers = #tpu.dot_dimension_numbers<[1], [0], [0], [1], [0, 0, 1, 1], [], []>} : vector<16x16xf32>, vector<16x32xf32>, vector<16x32xf32> -> vector<16x32xf32>
    %c0_6 = arith.constant 0 : index
    %c0_7 = arith.constant 0 : index
    %4 = vector.load %arg4[%c0_6, %c0_7] : memref<1x32xf32, #tpu.memory_space<vmem>>, vector<1x32xf32>
    %5 = vector.broadcast %4 : vector<1x32xf32> to vector<16x32xf32>
    %6 = arith.addf %3, %5 : vector<16x32xf32>
    %7 = math.tanh %6 : vector<16x32xf32>
    %8 = vector.shape_cast %7 : vector<16x32xf32> to vector<2x8x32xf32>
    %c0_8 = arith.constant 0 : index
    %c0_9 = arith.constant 0 : index
    %9 = vector.load %arg1[%c0_8, %c0_9] : memref<16x16xf32, #tpu.memory_space<vmem>>, vector<16x16xf32>
    %c0_10 = arith.constant 0 : index
    %c0_11 = arith.constant 0 : index
    %10 = vector.load %arg5[%c0_10, %c0_11] : memref<16x32xf32, #tpu.memory_space<vmem>>, vector<16x32xf32>
    %cst_12 = arith.constant dense<0.000000e+00> : vector<16x32xf32>
    %11 = tpu.matmul %9, %10, %cst_12 {dimension_numbers = #tpu.dot_dimension_numbers<[1], [0], [0], [1], [0, 0, 1, 1], [], []>} : vector<16x16xf32>, vector<16x32xf32>, vector<16x32xf32> -> vector<16x32xf32>
    %c0_13 = arith.constant 0 : index
    %c0_14 = arith.constant 0 : index
    %12 = vector.load %arg6[%c0_13, %c0_14] : memref<1x32xf32, #tpu.memory_space<vmem>>, vector<1x32xf32>
    %13 = vector.broadcast %12 : vector<1x32xf32> to vector<16x32xf32>
    %14 = arith.addf %11, %13 : vector<16x32xf32>
    %15 = tpu.iota {dimensions = array<i32: 0>} : vector<8x1xi32>
    %16 = vector.extract_strided_slice %0 {offsets = [0, 0, 0], sizes = [1, 1, 1], strides = [1, 1, 1]} : vector<2x1x1xi32> to vector<1x1x1xi32>
    %17 = vector.shape_cast %16 : vector<1x1x1xi32> to vector<1x1xi32>
    %c1_i32 = arith.constant 1 : i32
    %18 = vector.broadcast %c1_i32 : i32 to vector<1x1xi32>
    %19 = arith.maxsi %17, %18 : vector<1x1xi32>
    %20 = arith.sitofp %19 : vector<1x1xi32> to vector<1x1xf32>
    %cst_15 = arith.constant 1.000000e+00 : f32
    %21 = vector.broadcast %cst_15 : f32 to vector<1x1xf32>
    %22 = arith.divf %21, %20 : vector<1x1xf32>
    %23 = vector.broadcast %17 : vector<1x1xi32> to vector<8x1xi32>
    %24 = arith.cmpi slt, %15, %23 : vector<8x1xi32>
    %cst_16 = arith.constant 0.000000e+00 : f32
    %25 = vector.shape_cast %22 : vector<1x1xf32> to vector<1x1xf32>
    %26 = vector.broadcast %25 : vector<1x1xf32> to vector<8x1xf32>
    %27 = vector.broadcast %cst_16 : f32 to vector<8x1xf32>
    %28 = arith.select %24, %26, %27 : vector<8x1xi1>, vector<8x1xf32>
    %29 = vector.extract_strided_slice %8 {offsets = [0, 0, 0], sizes = [1, 8, 32], strides = [1, 1, 1]} : vector<2x8x32xf32> to vector<1x8x32xf32>
    %30 = vector.shape_cast %29 : vector<1x8x32xf32> to vector<8x32xf32>
    %31 = vector.broadcast %28 : vector<8x1xf32> to vector<8x32xf32>
    %32 = arith.mulf %30, %31 : vector<8x32xf32>
    %cst_17 = arith.constant dense<0.000000e+00> : vector<32xf32>
    %33 = vector.multi_reduction <add>, %32, %cst_17 [0] : vector<8x32xf32> to vector<32xf32>
    %34 = vector.shape_cast %33 : vector<32xf32> to vector<1x32xf32>
    %35 = vector.extract_strided_slice %14 {offsets = [0, 0], sizes = [8, 32], strides = [1, 1]} : vector<16x32xf32> to vector<8x32xf32>
    %36 = vector.broadcast %34 : vector<1x32xf32> to vector<8x32xf32>
    %37 = arith.addf %35, %36 : vector<8x32xf32>
    %38 = math.tanh %37 : vector<8x32xf32>
    %39 = vector.extract_strided_slice %0 {offsets = [1, 0, 0], sizes = [1, 1, 1], strides = [1, 1, 1]} : vector<2x1x1xi32> to vector<1x1x1xi32>
    %40 = vector.shape_cast %39 : vector<1x1x1xi32> to vector<1x1xi32>
    %c1_i32_18 = arith.constant 1 : i32
    %41 = vector.broadcast %c1_i32_18 : i32 to vector<1x1xi32>
    %42 = arith.maxsi %40, %41 : vector<1x1xi32>
    %43 = arith.sitofp %42 : vector<1x1xi32> to vector<1x1xf32>
    %cst_19 = arith.constant 1.000000e+00 : f32
    %44 = vector.broadcast %cst_19 : f32 to vector<1x1xf32>
    %45 = arith.divf %44, %43 : vector<1x1xf32>
    %46 = vector.broadcast %40 : vector<1x1xi32> to vector<8x1xi32>
    %47 = arith.cmpi slt, %15, %46 : vector<8x1xi32>
    %cst_20 = arith.constant 0.000000e+00 : f32
    %48 = vector.shape_cast %45 : vector<1x1xf32> to vector<1x1xf32>
    %49 = vector.broadcast %48 : vector<1x1xf32> to vector<8x1xf32>
    %50 = vector.broadcast %cst_20 : f32 to vector<8x1xf32>
    %51 = arith.select %47, %49, %50 : vector<8x1xi1>, vector<8x1xf32>
    %52 = vector.extract_strided_slice %8 {offsets = [1, 0, 0], sizes = [1, 8, 32], strides = [1, 1, 1]} : vector<2x8x32xf32> to vector<1x8x32xf32>
    %53 = vector.shape_cast %52 : vector<1x8x32xf32> to vector<8x32xf32>
    %54 = vector.broadcast %51 : vector<8x1xf32> to vector<8x32xf32>
    %55 = arith.mulf %53, %54 : vector<8x32xf32>
    %cst_21 = arith.constant dense<0.000000e+00> : vector<32xf32>
    %56 = vector.multi_reduction <add>, %55, %cst_21 [0] : vector<8x32xf32> to vector<32xf32>
    %57 = vector.shape_cast %56 : vector<32xf32> to vector<1x32xf32>
    %58 = vector.extract_strided_slice %14 {offsets = [8, 0], sizes = [8, 32], strides = [1, 1]} : vector<16x32xf32> to vector<8x32xf32>
    %59 = vector.broadcast %57 : vector<1x32xf32> to vector<8x32xf32>
    %60 = arith.addf %58, %59 : vector<8x32xf32>
    %61 = math.tanh %60 : vector<8x32xf32>
    %62 = tpu.concatenate %38, %61 in 0 : vector<8x32xf32>, vector<8x32xf32> -> vector<16x32xf32>
    %63 = vector.shape_cast %62 : vector<16x32xf32> to vector<2x8x32xf32>
    "tpu.trace_start"() <{level = 10 : i32, message = "bth,bsh->bts"}> : () -> ()
    %cst_22 = arith.constant dense<0.000000e+00> : vector<2x8x8xf32>
    %64 = tpu.matmul %63, %8, %cst_22 {dimension_numbers = #tpu.dot_dimension_numbers<[2], [2], [1], [1], [0, 0, 0, 1, 1, 1], [0], [0]>} : vector<2x8x32xf32>, vector<2x8x32xf32>, vector<2x8x8xf32> -> vector<2x8x8xf32>
    "tpu.trace_stop"() : () -> ()
    %65 = tpu.iota {dimensions = array<i32: 2>} : vector<2x8x8xi32>
    %66 = vector.broadcast %0 : vector<2x1x1xi32> to vector<2x8x8xi32>
    %67 = arith.cmpi slt, %65, %66 : vector<2x8x8xi32>
    %cst_23 = arith.constant -1.000000e+30 : f32
    %68 = vector.broadcast %cst_23 : f32 to vector<2x8x8xf32>
    %69 = arith.select %67, %64, %68 : vector<2x8x8xi1>, vector<2x8x8xf32>
    %cst_24 = arith.constant dense<0xFF800000> : vector<2x8xf32>
    %70 = vector.multi_reduction <maximumf>, %69, %cst_24 [2] : vector<2x8x8xf32> to vector<2x8xf32>
    %71 = vector.shape_cast %70 : vector<2x8xf32> to vector<2x8x1xf32>
    %72 = vector.broadcast %71 : vector<2x8x1xf32> to vector<2x8x8xf32>
    %73 = arith.subf %69, %72 : vector<2x8x8xf32>
    %74 = math.exp %73 : vector<2x8x8xf32>
    %cst_25 = arith.constant dense<0.000000e+00> : vector<2x8xf32>
    %75 = vector.multi_reduction <add>, %74, %cst_25 [2] : vector<2x8x8xf32> to vector<2x8xf32>
    %76 = vector.shape_cast %75 : vector<2x8xf32> to vector<2x8x1xf32>
    %77 = tpu.reciprocal %76 : vector<2x8x1xf32> -> vector<2x8x1xf32>
    %78 = vector.broadcast %77 : vector<2x8x1xf32> to vector<2x8x8xf32>
    %79 = arith.mulf %74, %78 : vector<2x8x8xf32>
    "tpu.trace_start"() <{level = 10 : i32, message = "bts,bsh->bth"}> : () -> ()
    %cst_26 = arith.constant dense<0.000000e+00> : vector<2x8x32xf32>
    %80 = tpu.matmul %79, %8, %cst_26 {dimension_numbers = #tpu.dot_dimension_numbers<[2], [1], [1], [2], [0, 0, 0, 1, 1, 2], [0], [0]>} : vector<2x8x8xf32>, vector<2x8x32xf32>, vector<2x8x32xf32> -> vector<2x8x32xf32>
    "tpu.trace_stop"() : () -> ()
    %81 = vector.shape_cast %80 : vector<2x8x32xf32> to vector<16x32xf32>
    %82 = tpu.concatenate %81, %62 in 1 : vector<16x32xf32>, vector<16x32xf32> -> vector<16x64xf32>
    %c0_27 = arith.constant 0 : index
    %c0_28 = arith.constant 0 : index
    %83 = vector.load %arg7[%c0_27, %c0_28] : memref<64x32xf32, #tpu.memory_space<vmem>>, vector<64x32xf32>
    %cst_29 = arith.constant dense<0.000000e+00> : vector<16x32xf32>
    %84 = tpu.matmul %82, %83, %cst_29 {dimension_numbers = #tpu.dot_dimension_numbers<[1], [0], [0], [1], [0, 0, 1, 1], [], []>} : vector<16x64xf32>, vector<64x32xf32>, vector<16x32xf32> -> vector<16x32xf32>
    %c0_30 = arith.constant 0 : index
    %c0_31 = arith.constant 0 : index
    %85 = vector.load %arg8[%c0_30, %c0_31] : memref<1x32xf32, #tpu.memory_space<vmem>>, vector<1x32xf32>
    %86 = vector.broadcast %85 : vector<1x32xf32> to vector<16x32xf32>
    %87 = arith.addf %84, %86 : vector<16x32xf32>
    %88 = math.tanh %87 : vector<16x32xf32>
    %89 = vector.shape_cast %79 : vector<2x8x8xf32> to vector<16x8xf32>
    %90 = vector.extract_strided_slice %88 {offsets = [0, 0], sizes = [8, 32], strides = [1, 1]} : vector<16x32xf32> to vector<8x32xf32>
    %c0_32 = arith.constant 0 : index
    %c0_33 = arith.constant 0 : index
    %91 = vector.load %arg9[%c0_32, %c0_33] : memref<8x64xf32, #tpu.memory_space<vmem>>, vector<8x32xf32>
    tpu.vector_store %arg9[%c0_32, %c0_33], %90 {strides = array<i32>} : memref<8x64xf32, #tpu.memory_space<vmem>>, vector<8x32xf32>,
    %92 = vector.extract_strided_slice %89 {offsets = [0, 0], sizes = [8, 8], strides = [1, 1]} : vector<16x8xf32> to vector<8x8xf32>
    %c0_34 = arith.constant 0 : index
    %c0_35 = arith.constant 0 : index
    %93 = vector.load %arg10[%c0_34, %c0_35] : memref<8x16xf32, #tpu.memory_space<vmem>>, vector<8x8xf32>
    tpu.vector_store %arg10[%c0_34, %c0_35], %92 {strides = array<i32>} : memref<8x16xf32, #tpu.memory_space<vmem>>, vector<8x8xf32>,
    %94 = vector.extract_strided_slice %88 {offsets = [8, 0], sizes = [8, 32], strides = [1, 1]} : vector<16x32xf32> to vector<8x32xf32>
    %c0_36 = arith.constant 0 : index
    %c32 = arith.constant 32 : index
    %95 = vector.load %arg9[%c0_36, %c32] : memref<8x64xf32, #tpu.memory_space<vmem>>, vector<8x32xf32>
    tpu.vector_store %arg9[%c0_36, %c32], %94 {strides = array<i32>} : memref<8x64xf32, #tpu.memory_space<vmem>>, vector<8x32xf32>,
    %96 = vector.extract_strided_slice %89 {offsets = [8, 0], sizes = [8, 8], strides = [1, 1]} : vector<16x8xf32> to vector<8x8xf32>
    %c0_37 = arith.constant 0 : index
    %c8 = arith.constant 8 : index
    %97 = vector.load %arg10[%c0_37, %c8] : memref<8x16xf32, #tpu.memory_space<vmem>>, vector<8x8xf32>
    tpu.vector_store %arg10[%c0_37, %c8], %96 {strides = array<i32>} : memref<8x16xf32, #tpu.memory_space<vmem>>, vector<8x8xf32>,
    return
  }
}

</mosaic_0001>

<llo_original>
// kernel: tpu_custom_call.1
$region0: #{tpu_custom_call.1}
  #allocation0 [shape = 'u32[]', space=smem, size = 0x4, offset = 0x4, fixed_abs, tag = 'smem constant byte address 0x4 - core index']
  #allocation1 [shape = 'u32[144,128]{1,0:T(1,128)}', space=vmem, size = 0x12000, scoped, tag = 'internal scratch']
  %s0 = inlined_call_operand.vmem [shape: f32[16,16], index: 0, kind: input, shape index: {}]
  %s1 = inlined_call_operand.vmem [shape: f32[16,16], index: 1, kind: input, shape index: {}]
  %s2 = inlined_call_operand.vmem [shape: s32[2,1,1], index: 2, kind: input, shape index: {}]
  %s3 = inlined_call_operand.vmem [shape: f32[16,32], index: 3, kind: input, shape index: {}]
  %s4 = inlined_call_operand.vmem [shape: f32[1,32], index: 4, kind: input, shape index: {}]
  %s5 = inlined_call_operand.vmem [shape: f32[16,32], index: 5, kind: input, shape index: {}]
  %s6 = inlined_call_operand.vmem [shape: f32[1,32], index: 6, kind: input, shape index: {}]
  %s7 = inlined_call_operand.vmem [shape: f32[64,32], index: 7, kind: input, shape index: {}]
  %s8 = inlined_call_operand.vmem [shape: f32[1,32], index: 8, kind: input, shape index: {}]
  %s9 = inlined_call_operand.hbm [shape: f32[8,64], index: 9, kind: output, shape index: {0}]
  %s10 = inlined_call_operand.hbm [shape: f32[8,16], index: 10, kind: output, shape index: {1}]
  %11 = xla_tuple %s9, %s10
  %s12 = sld [smem:[#allocation0]]
  $region54: #{tpu_custom_call.1} parent=0
    _
  %s14 = ssub.s32 1, %s12
  %s15 = scalar_select 0, %s14, %s12
  $region1: #{tpu_custom_call.1} parent=0
    #allocation2 [shape = 'u8[4096]{0}', space=vmem, size = 0x1000, scoped, tag = 'output window, operand 0, single buffered']
    #allocation3 [shape = 's32[1]{0}', space=sflag, size = 0x4, scoped, tag = 'scoped memory for tpu_custom_call.1']
    #allocation4 [shape = 'u8[4096]{0}', space=vmem, size = 0x1000, scoped, tag = 'output window, operand 1, single buffered']
    #allocation5 [shape = 's32[1]{0}', space=sflag, size = 0x4, scoped, tag = 'scoped memory for tpu_custom_call.1']
    %16 = vsyncpa [#allocation3], 0
    %17 = vsyncpa [#allocation5], 0
    // Predicated region
    $region2: #{tpu_custom_call.1} parent=1 // pred_check
      _
    $region3: #{tpu_custom_call.1} parent=1 // pred_check_branch
      %19 = sbr.rel (0) target = $region5
    $region4: #{tpu_custom_call.1} parent=1 // pred_region
      _
    $region5: #{tpu_custom_call.1} parent=1 // pred_fallthru
      _
    // Predicated region
    $region6: #{tpu_custom_call.1} parent=1 // pred_check
      _
    $region7: #{tpu_custom_call.1} parent=1 // pred_check_branch
      %21 = sbr.rel (0) target = $region9
    $region8: #{tpu_custom_call.1} parent=1 // pred_region
      _
    $region9: #{tpu_custom_call.1} parent=1 // pred_fallthru
      _
    // Predicated region
    $region10: #{tpu_custom_call.1} parent=1 // pred_check
      _
    $region11: #{tpu_custom_call.1} parent=1 // pred_check_branch
      %23 = sbr.rel (0) target = $region13
    $region12: #{tpu_custom_call.1} parent=1 // pred_region
      _
    $region13: #{tpu_custom_call.1} parent=1 // pred_fallthru
      _
    // Predicated region
    $region14: #{tpu_custom_call.1} parent=1 // pred_check
      _
    $region15: #{tpu_custom_call.1} parent=1 // pred_check_branch
      %25 = sbr.rel (0) target = $region17
    $region16: #{tpu_custom_call.1} parent=1 // pred_region
      _
    $region17: #{tpu_custom_call.1} parent=1 // pred_fallthru
      _
    // Predicated region
    $region18: #{tpu_custom_call.1} parent=1 // pred_check
      _
    $region19: #{tpu_custom_call.1} parent=1 // pred_check_branch
      %27 = sbr.rel (0) target = $region21
    $region20: #{tpu_custom_call.1} parent=1 // pred_region
      _
    $region21: #{tpu_custom_call.1} parent=1 // pred_fallthru
      _
    // Predicated region
    $region22: #{tpu_custom_call.1} parent=1 // pred_check
      _
    $region23: #{tpu_custom_call.1} parent=1 // pred_check_branch
      %29 = sbr.rel (0) target = $region25
    $region24: #{tpu_custom_call.1} parent=1 // pred_region
      _
    $region25: #{tpu_custom_call.1} parent=1 // pred_fallthru
      _
    // Predicated region
    $region26: #{tpu_custom_call.1} parent=1 // pred_check
      _
    $region27: #{tpu_custom_call.1} parent=1 // pred_check_branch
      %31 = sbr.rel (0) target = $region29
    $region28: #{tpu_custom_call.1} parent=1 // pred_region
      _
    $region29: #{tpu_custom_call.1} parent=1 // pred_fallthru
      _
    // Predicated region
    $region30: #{tpu_custom_call.1} parent=1 // pred_check
      _
    $region31: #{tpu_custom_call.1} parent=1 // pred_check_branch
      %33 = sbr.rel (0) target = $region33
    $region32: #{tpu_custom_call.1} parent=1 // pred_region
      _
    $region33: #{tpu_custom_call.1} parent=1 // pred_fallthru
      _
    // Predicated region
    $region34: #{tpu_custom_call.1} parent=1 // pred_check
      _
    $region35: #{tpu_custom_call.1} parent=1 // pred_check_branch
      %35 = sbr.rel (0) target = $region37
    $region36: #{tpu_custom_call.1} parent=1 // pred_region
      _
    $region37: #{tpu_custom_call.1} parent=1 // pred_fallthru
      _
    %v36 = vld [vmem:[%s2] sm:$0x1]
    %v37 = vld [vmem:[%s2 + $0x1] sm:$0x1]
    %v38 = vld [vmem:[%s0] sm:$0xff]
    %v39 = vld [vmem:[%s0 + $0x8] sm:$0xff]
    %v40 = vld [vmem:[%s3] sm:$0xff]
    %v41 = vld [vmem:[%s3 + $0x8] sm:$0xff]
    %v42 = vld [vmem:[%s4] sm:$0x1]
    %v44 = vlaneseq
    %v45 = vshrl.u32 %v44, 7
    %v46 = vsub.s32 0, %v45
    %v47 = vrot.slane %v42, %v46
    %vm49 = vcmask 130048
    %v51 = vsel %vm49, %v38, 0
    %v54 = vsel %vm49, %v39, 0
    %56 = vmatprep.subr.mxu0 0.0
    %57 = vmatpush1.msra.mxu0 %v40
    %58 = vmatprep.subr.mxu0 0.0
    %59 = vmatpush1.msra.mxu0 %v41
    %60 = vmatprep.subr.mxu0 0.0
    %61 = vmatpush1.msra.mxu0 0.0
    %62 = vmatprep.subr.mxu0 0.0
    %63 = vmatpush1.msra.mxu0 0.0
    %64 = vmatprep.subr.mxu0 0.0
    %65 = vmatpush1.msra.mxu0 0.0
    %66 = vmatprep.subr.mxu0 0.0
    %67 = vmatpush1.msra.mxu0 0.0
    %68 = vmatprep.subr.mxu0 0.0
    %69 = vmatpush1.msra.mxu0 0.0
    %70 = vmatprep.subr.mxu0 0.0
    %71 = vmatpush1.msra.mxu0 0.0
    %72 = vmatprep.subr.mxu0 0.0
    %73 = vmatpush1.msra.mxu0 0.0
    %74 = vmatprep.subr.mxu0 0.0
    %75 = vmatpush1.msra.mxu0 0.0
    %76 = vmatprep.subr.mxu0 0.0
    %77 = vmatpush1.msra.mxu0 0.0
    %78 = vmatprep.subr.mxu0 0.0
    %79 = vmatpush1.msra.mxu0 0.0
    %80 = vmatprep.subr.mxu0 0.0
    %81 = vmatpush1.msra.mxu0 0.0
    %82 = vmatprep.subr.mxu0 0.0
    %83 = vmatpush1.msra.mxu0 0.0
    %84 = vmatprep.subr.mxu0 0.0
    %85 = vmatpush1.msra.mxu0 0.0
    %86 = vmatprep.subr.mxu0 0.0
    %87 = vmatpush1.msra.mxu0 0.0
    %88 = vmatprep.subr.mxu0 0.0
    %89 = vmatpush1.msra.mxu0 0.0
    %90 = vmatprep.subr.mxu0 0.0
    %91 = vmatpush1.msra.mxu0 0.0
    %92 = vmatprep.subr.mxu0 0.0
    %93 = vmatpush1.msra.mxu0 0.0
    %94 = vmatprep.subr.mxu0 0.0
    %95 = vmatpush1.msra.mxu0 0.0
    %96 = vmatprep.subr.mxu0 0.0
    %97 = vmatpush1.msra.mxu0 0.0
    %98 = vmatprep.subr.mxu0 0.0
    %99 = vmatpush1.msra.mxu0 0.0
    %100 = vmatprep.subr.mxu0 0.0
    %101 = vmatpush1.msra.mxu0 0.0
    %102 = vmatprep.subr.mxu0 0.0
    %103 = vmatpush1.msra.mxu0 0.0
    %104 = vmatprep.subr.mxu0 0.0
    %105 = vmatpush1.msra.mxu0 0.0
    %106 = vmatprep.subr.mxu0 0.0
    %107 = vmatpush1.msra.mxu0 0.0
    %108 = vmatprep.subr.mxu0 0.0
    %109 = vmatpush1.msra.mxu0 0.0
    %110 = vmatprep.subr.mxu0 0.0
    %111 = vmatpush1.msra.mxu0 0.0
    %112 = vmatprep.subr.mxu0 0.0
    %113 = vmatpush1.msra.mxu0 0.0
    %114 = vmatprep.subr.mxu0 0.0
    %115 = vmatpush1.msra.mxu0 0.0
    %116 = vmatprep.subr.mxu0 0.0
    %117 = vmatpush1.msra.mxu0 0.0
    %118 = vmatprep.subr.mxu0 0.0
    %119 = vmatpush1.msra.mxu0 0.0
    %120 = vmatprep.mubr.f32.mxu0 0.0
    %121 = vmatmul.mubr.f32.gmra.mrb[0].mxu0 %v51
    %v122 = vpop.f32.mrb[0].mxu0
    %v123 = vadd.f32 %v47, %v122
    %v124 = vpop.f32.mrb[0].mxu0
    %125 = vmatprep.mubr.f32.mxu0 0.0
    %126 = vmatmul.mubr.f32.gmra.mrb[0].mxu0 %v54
    %v127 = vpop.f32.mrb[0].mxu0
    %v128 = vadd.f32 %v47, %v127
    %v129 = vpop.f32.mrb[0].mxu0
    %130 = vdwg.mxu0
    %v131 = vtanh.pop %v123
    %v132 = vtanh.pop %v128
    %v133 = vld [vmem:[%s1] sm:$0xff]
    %v134 = vld [vmem:[%s1 + $0x8] sm:$0xff]
    %v135 = vld [vmem:[%s5] sm:$0xff]
    %v136 = vld [vmem:[%s5 + $0x8] sm:$0xff]
    %v137 = vld [vmem:[%s6] sm:$0x1]
    %v139 = vlaneseq
    %v140 = vshrl.u32 %v139, 7
    %v141 = vsub.s32 0, %v140
    %v142 = vrot.slane %v137, %v141
    %v145 = vsel %vm49, %v133, 0
    %v148 = vsel %vm49, %v134, 0
    %150 = vmatprep.subr.mxu0 0.0
    %151 = vmatpush1.msra.mxu0 %v135
    %152 = vmatprep.subr.mxu0 0.0
    %153 = vmatpush1.msra.mxu0 %v136
    %154 = vmatprep.subr.mxu0 0.0
    %155 = vmatpush1.msra.mxu0 0.0
    %156 = vmatprep.subr.mxu0 0.0
    %157 = vmatpush1.msra.mxu0 0.0
    %158 = vmatprep.subr.mxu0 0.0
    %159 = vmatpush1.msra.mxu0 0.0
    %160 = vmatprep.subr.mxu0 0.0
    %161 = vmatpush1.msra.mxu0 0.0
    %162 = vmatprep.subr.mxu0 0.0
    %163 = vmatpush1.msra.mxu0 0.0
    %164 = vmatprep.subr.mxu0 0.0
    %165 = vmatpush1.msra.mxu0 0.0
    %166 = vmatprep.subr.mxu0 0.0
    %167 = vmatpush1.msra.mxu0 0.0
    %168 = vmatprep.subr.mxu0 0.0
    %169 = vmatpush1.msra.mxu0 0.0
    %170 = vmatprep.subr.mxu0 0.0
    %171 = vmatpush1.msra.mxu0 0.0
    %172 = vmatprep.subr.mxu0 0.0
    %173 = vmatpush1.msra.mxu0 0.0
    %174 = vmatprep.subr.mxu0 0.0
    %175 = vmatpush1.msra.mxu0 0.0
    %176 = vmatprep.subr.mxu0 0.0
    %177 = vmatpush1.msra.mxu0 0.0
    %178 = vmatprep.subr.mxu0 0.0
    %179 = vmatpush1.msra.mxu0 0.0
    %180 = vmatprep.subr.mxu0 0.0
    %181 = vmatpush1.msra.mxu0 0.0
    %182 = vmatprep.subr.mxu0 0.0
    %183 = vmatpush1.msra.mxu0 0.0
    %184 = vmatprep.subr.mxu0 0.0
    %185 = vmatpush1.msra.mxu0 0.0
    %186 = vmatprep.subr.mxu0 0.0
    %187 = vmatpush1.msra.mxu0 0.0
    %188 = vmatprep.subr.mxu0 0.0
    %189 = vmatpush1.msra.mxu0 0.0
    %190 = vmatprep.subr.mxu0 0.0
    %191 = vmatpush1.msra.mxu0 0.0
    %192 = vmatprep.subr.mxu0 0.0
    %193 = vmatpush1.msra.mxu0 0.0
    %194 = vmatprep.subr.mxu0 0.0
    %195 = vmatpush1.msra.mxu0 0.0
    %196 = vmatprep.subr.mxu0 0.0
    %197 = vmatpush1.msra.mxu0 0.0
    %198 = vmatprep.subr.mxu0 0.0
    %199 = vmatpush1.msra.mxu0 0.0
    %200 = vmatprep.subr.mxu0 0.0
    %201 = vmatpush1.msra.mxu0 0.0
    %202 = vmatprep.subr.mxu0 0.0
    %203 = vmatpush1.msra.mxu0 0.0
    %204 = vmatprep.subr.mxu0 0.0
    %205 = vmatpush1.msra.mxu0 0.0
    %206 = vmatprep.subr.mxu0 0.0
    %207 = vmatpush1.msra.mxu0 0.0
    %208 = vmatprep.subr.mxu0 0.0
    %209 = vmatpush1.msra.mxu0 0.0
    %210 = vmatprep.subr.mxu0 0.0
    %211 = vmatpush1.msra.mxu0 0.0
    %212 = vmatprep.subr.mxu0 0.0
    %213 = vmatpush1.msra.mxu0 0.0
    %214 = vmatprep.mubr.f32.mxu0 0.0
    %215 = vmatmul.mubr.f32.gmra.mrb[0].mxu0 %v145
    %v216 = vpop.f32.mrb[0].mxu0
    %v217 = vadd.f32 %v142, %v216
    %v218 = vpop.f32.mrb[0].mxu0
    %219 = vmatprep.mubr.f32.mxu0 0.0
    %220 = vmatmul.mubr.f32.gmra.mrb[0].mxu0 %v148
    %v221 = vpop.f32.mrb[0].mxu0
    %v222 = vadd.f32 %v142, %v221
    %v223 = vpop.f32.mrb[0].mxu0
    %224 = vdwg.mxu0
    %v225 = vlaneseq
    %v226 = vshrl.u32 %v225, 7
    %vm227 = vcmp.gt.s32.totalorder %v36, 1
    %v228 = vsel %vm227, %v36, 1
    %v229 = vcvt.s32.f32 %v228
    %v230 = vrcp.pop %v229
    %v231 = vmul.f32 1.0, %v230
    %v232 = vlaneseq
    %v233 = vshrl.u32 %v232, 7
    %v234 = vsub.s32 0, %v233
    %v235 = vrot.slane %v36, %v234
    %vm236 = vcmp.lt.s32.totalorder %v226, %v235
    %v238 = vlaneseq
    %v239 = vshrl.u32 %v238, 7
    %v240 = vsub.s32 0, %v239
    %v241 = vrot.slane %v231, %v240
    %v243 = vsel %vm236, %v241, 0.0
    %245 = vset.pattern.permute.xlu0 0
    %246 = vperm.xlu0 %245, %v243
    %v247 = vpop.permute.xlu0 %246
    %v249 = vmul.f32 %v131, %v247
    %vm250 = vcmask 261120
    %v251 = vsel %vm250, %v249, 0.0
    %v252 = vrot.slane %v251, 4
    %v253 = vadd.f32 %v251, %v252
    %v254 = vrot.slane %v253, 2
    %v255 = vadd.f32 %v253, %v254
    %v256 = vrot.slane %v255, 1
    %v257 = vadd.f32 %v255, %v256
    %v258 = vadd.f32 %v217, %v257
    %v259 = vtanh.pop %v258
    %vm260 = vcmp.gt.s32.totalorder %v37, 1
    %v261 = vsel %vm260, %v37, 1
    %v262 = vcvt.s32.f32 %v261
    %v263 = vrcp.pop %v262
    %v264 = vmul.f32 1.0, %v263
    %v265 = vlaneseq
    %v266 = vshrl.u32 %v265, 7
    %v267 = vsub.s32 0, %v266
    %v268 = vrot.slane %v37, %v267
    %vm269 = vcmp.lt.s32.totalorder %v226, %v268
    %v271 = vlaneseq
    %v272 = vshrl.u32 %v271, 7
    %v273 = vsub.s32 0, %v272
    %v274 = vrot.slane %v264, %v273
    %v276 = vsel %vm269, %v274, 0.0
    %278 = vset.pattern.permute.xlu0 0
    %279 = vperm.xlu0 %278, %v276
    %v280 = vpop.permute.xlu0 %279
    %v282 = vmul.f32 %v132, %v280
    %v283 = vsel %vm250, %v282, 0.0
    %v284 = vrot.slane %v283, 4
    %v285 = vadd.f32 %v283, %v284
    %v286 = vrot.slane %v285, 2
    %v287 = vadd.f32 %v285, %v286
    %v288 = vrot.slane %v287, 1
    %v289 = vadd.f32 %v287, %v288
    %v290 = vadd.f32 %v222, %v289
    %v291 = vtanh.pop %v290
    %v293 = vsel %vm250, %v259, 0
    %v296 = vsel %vm250, %v131, 0
    %298 = vmatprep.subr.mxu0 0.0
    %299 = vmatpush1.xpose.msra.mxu0 %v296
    %300 = vmatprep.subr.mxu0 0.0
    %301 = vmatpush1.xpose.msra.mxu0 0.0
    %302 = vmatprep.subr.mxu0 0.0
    %303 = vmatpush1.xpose.msra.mxu0 0.0
    %304 = vmatprep.subr.mxu0 0.0
    %305 = vmatpush1.xpose.msra.mxu0 0.0
    %306 = vmatprep.subr.mxu0 0.0
    %307 = vmatpush1.xpose.msra.mxu0 0.0
    %308 = vmatprep.subr.mxu0 0.0
    %309 = vmatpush1.xpose.msra.mxu0 0.0
    %310 = vmatprep.subr.mxu0 0.0
    %311 = vmatpush1.xpose.msra.mxu0 0.0
    %312 = vmatprep.subr.mxu0 0.0
    %313 = vmatpush1.xpose.msra.mxu0 0.0
    %314 = vmatprep.subr.mxu0 0.0
    %315 = vmatpush1.xpose.msra.mxu0 0.0
    %316 = vmatprep.subr.mxu0 0.0
    %317 = vmatpush1.xpose.msra.mxu0 0.0
    %318 = vmatprep.subr.mxu0 0.0
    %319 = vmatpush1.xpose.msra.mxu0 0.0
    %320 = vmatprep.subr.mxu0 0.0
    %321 = vmatpush1.xpose.msra.mxu0 0.0
    %322 = vmatprep.subr.mxu0 0.0
    %323 = vmatpush1.xpose.msra.mxu0 0.0
    %324 = vmatprep.subr.mxu0 0.0
    %325 = vmatpush1.xpose.msra.mxu0 0.0
    %326 = vmatprep.subr.mxu0 0.0
    %327 = vmatpush1.xpose.msra.mxu0 0.0
    %328 = vmatprep.subr.mxu0 0.0
    %329 = vmatpush1.xpose.msra.mxu0 0.0
    %330 = vmatprep.subr.mxu0 0.0
    %331 = vmatpush1.xpose.msra.mxu0 0.0
    %332 = vmatprep.subr.mxu0 0.0
    %333 = vmatpush1.xpose.msra.mxu0 0.0
    %334 = vmatprep.subr.mxu0 0.0
    %335 = vmatpush1.xpose.msra.mxu0 0.0
    %336 = vmatprep.subr.mxu0 0.0
    %337 = vmatpush1.xpose.msra.mxu0 0.0
    %338 = vmatprep.subr.mxu0 0.0
    %339 = vmatpush1.xpose.msra.mxu0 0.0
    %340 = vmatprep.subr.mxu0 0.0
    %341 = vmatpush1.xpose.msra.mxu0 0.0
    %342 = vmatprep.subr.mxu0 0.0
    %343 = vmatpush1.xpose.msra.mxu0 0.0
    %344 = vmatprep.subr.mxu0 0.0
    %345 = vmatpush1.xpose.msra.mxu0 0.0
    %346 = vmatprep.subr.mxu0 0.0
    %347 = vmatpush1.xpose.msra.mxu0 0.0
    %348 = vmatprep.subr.mxu0 0.0
    %349 = vmatpush1.xpose.msra.mxu0 0.0
    %350 = vmatprep.subr.mxu0 0.0
    %351 = vmatpush1.xpose.msra.mxu0 0.0
    %352 = vmatprep.subr.mxu0 0.0
    %353 = vmatpush1.xpose.msra.mxu0 0.0
    %354 = vmatprep.subr.mxu0 0.0
    %355 = vmatpush1.xpose.msra.mxu0 0.0
    %356 = vmatprep.subr.mxu0 0.0
    %357 = vmatpush1.xpose.msra.mxu0 0.0
    %358 = vmatprep.subr.mxu0 0.0
    %359 = vmatpush1.xpose.msra.mxu0 0.0
    %360 = vmatprep.subr.mxu0 0.0
    %361 = vmatpush1.xpose.msra.mxu0 0.0
    %362 = vmatprep.mubr.f32.mxu0 0.0
    %363 = vmatmul.mubr.f32.gmra.mrb[0].mxu0 %v293
    %v364 = vpop.f32.mrb[0].mxu0
    %v365 = vadd.f32 0.0, %v364
    %v366 = vpop.f32.mrb[0].mxu0
    %367 = vdwg.mxu0
    %v369 = vsel %vm250, %v291, 0
    %v372 = vsel %vm250, %v132, 0
    %374 = vmatprep.subr.mxu0 0.0
    %375 = vmatpush1.xpose.msra.mxu0 %v372
    %376 = vmatprep.subr.mxu0 0.0
    %377 = vmatpush1.xpose.msra.mxu0 0.0
    %378 = vmatprep.subr.mxu0 0.0
    %379 = vmatpush1.xpose.msra.mxu0 0.0
    %380 = vmatprep.subr.mxu0 0.0
    %381 = vmatpush1.xpose.msra.mxu0 0.0
    %382 = vmatprep.subr.mxu0 0.0
    %383 = vmatpush1.xpose.msra.mxu0 0.0
    %384 = vmatprep.subr.mxu0 0.0
    %385 = vmatpush1.xpose.msra.mxu0 0.0
    %386 = vmatprep.subr.mxu0 0.0
    %387 = vmatpush1.xpose.msra.mxu0 0.0
    %388 = vmatprep.subr.mxu0 0.0
    %389 = vmatpush1.xpose.msra.mxu0 0.0
    %390 = vmatprep.subr.mxu0 0.0
    %391 = vmatpush1.xpose.msra.mxu0 0.0
    %392 = vmatprep.subr.mxu0 0.0
    %393 = vmatpush1.xpose.msra.mxu0 0.0
    %394 = vmatprep.subr.mxu0 0.0
    %395 = vmatpush1.xpose.msra.mxu0 0.0
    %396 = vmatprep.subr.mxu0 0.0
    %397 = vmatpush1.xpose.msra.mxu0 0.0
    %398 = vmatprep.subr.mxu0 0.0
    %399 = vmatpush1.xpose.msra.mxu0 0.0
    %400 = vmatprep.subr.mxu0 0.0
    %401 = vmatpush1.xpose.msra.mxu0 0.0
    %402 = vmatprep.subr.mxu0 0.0
    %403 = vmatpush1.xpose.msra.mxu0 0.0
    %404 = vmatprep.subr.mxu0 0.0
    %405 = vmatpush1.xpose.msra.mxu0 0.0
    %406 = vmatprep.subr.mxu0 0.0
    %407 = vmatpush1.xpose.msra.mxu0 0.0
    %408 = vmatprep.subr.mxu0 0.0
    %409 = vmatpush1.xpose.msra.mxu0 0.0
    %410 = vmatprep.subr.mxu0 0.0
    %411 = vmatpush1.xpose.msra.mxu0 0.0
    %412 = vmatprep.subr.mxu0 0.0
    %413 = vmatpush1.xpose.msra.mxu0 0.0
    %414 = vmatprep.subr.mxu0 0.0
    %415 = vmatpush1.xpose.msra.mxu0 0.0
    %416 = vmatprep.subr.mxu0 0.0
    %417 = vmatpush1.xpose.msra.mxu0 0.0
    %418 = vmatprep.subr.mxu0 0.0
    %419 = vmatpush1.xpose.msra.mxu0 0.0
    %420 = vmatprep.subr.mxu0 0.0
    %421 = vmatpush1.xpose.msra.mxu0 0.0
    %422 = vmatprep.subr.mxu0 0.0
    %423 = vmatpush1.xpose.msra.mxu0 0.0
    %424 = vmatprep.subr.mxu0 0.0
    %425 = vmatpush1.xpose.msra.mxu0 0.0
    %426 = vmatprep.subr.mxu0 0.0
    %427 = vmatpush1.xpose.msra.mxu0 0.0
    %428 = vmatprep.subr.mxu0 0.0
    %429 = vmatpush1.xpose.msra.mxu0 0.0
    %430 = vmatprep.subr.mxu0 0.0
    %431 = vmatpush1.xpose.msra.mxu0 0.0
    %432 = vmatprep.subr.mxu0 0.0
    %433 = vmatpush1.xpose.msra.mxu0 0.0
    %434 = vmatprep.subr.mxu0 0.0
    %435 = vmatpush1.xpose.msra.mxu0 0.0
    %436 = vmatprep.subr.mxu0 0.0
    %437 = vmatpush1.xpose.msra.mxu0 0.0
    %438 = vmatprep.mubr.f32.mxu0 0.0
    %439 = vmatmul.mubr.f32.gmra.mrb[0].mxu0 %v369
    %v440 = vpop.f32.mrb[0].mxu0
    %v441 = vadd.f32 0.0, %v440
    %v442 = vpop.f32.mrb[0].mxu0
    %443 = vdwg.mxu0
    %v444 = vlaneseq
    %v445 = vand.u32 %v444, 127
    %446 = vset.pattern.permute.xlu0 0
    %447 = vperm.xlu0 %446, %v235
    %v448 = vpop.permute.xlu0 %447
    %449 = vset.pattern.permute.xlu0 0
    %450 = vperm.xlu0 %449, %v268
    %v451 = vpop.permute.xlu0 %450
    %vm452 = vcmp.lt.s32.totalorder %v445, %v448
    %vm453 = vcmp.lt.s32.totalorder %v445, %v451
    %v454 = vsel %vm452, %v365, -1e+30
    %v455 = vsel %vm453, %v441, -1e+30
    %vm456 = vcmask 64512
    %v457 = vsel %vm456, %v454, -inf
    %458 = vmax.xlane.f32.xlu0 %v457
    %v459 = vpop.xlane.xlu0 %458
    %v460 = vsel %vm456, %v455, -inf
    %461 = vmax.xlane.f32.xlu0 %v460
    %v462 = vpop.xlane.xlu0 %461
    %v463 = vsub.f32 %v454, %v459
    %v464 = vsub.f32 %v455, %v462
    %v465 = vmul.f32 %v463, 1.442695
    %v466 = vpow.pop %v465
    %v467 = vmul.f32 %v464, 1.442695
    %v468 = vpow.pop %v467
    %v469 = vsel %vm456, %v466, 0.0
    %470 = vadd.xlane.f32.xlu0 %v469
    %v471 = vpop.xlane.xlu0 %470
    %v472 = vsel %vm456, %v468, 0.0
    %473 = vadd.xlane.f32.xlu0 %v472
    %v474 = vpop.xlane.xlu0 %473
    %v475 = vrcp.pop %v471
    %v476 = vrcp.pop %v474
    %v477 = vmul.f32 %v466, %v475
    %v478 = vmul.f32 %v468, %v476
    %v480 = vsel %vm456, %v477, 0
    %482 = vmatprep.subr.mxu0 0.0
    %483 = vmatpush1.msra.mxu0 %v131
    %484 = vmatprep.subr.mxu0 0.0
    %485 = vmatpush1.msra.mxu0 0.0
    %486 = vmatprep.subr.mxu0 0.0
    %487 = vmatpush1.msra.mxu0 0.0
    %488 = vmatprep.subr.mxu0 0.0
    %489 = vmatpush1.msra.mxu0 0.0
    %490 = vmatprep.subr.mxu0 0.0
    %491 = vmatpush1.msra.mxu0 0.0
    %492 = vmatprep.subr.mxu0 0.0
    %493 = vmatpush1.msra.mxu0 0.0
    %494 = vmatprep.subr.mxu0 0.0
    %495 = vmatpush1.msra.mxu0 0.0
    %496 = vmatprep.subr.mxu0 0.0
    %497 = vmatpush1.msra.mxu0 0.0
    %498 = vmatprep.subr.mxu0 0.0
    %499 = vmatpush1.msra.mxu0 0.0
    %500 = vmatprep.subr.mxu0 0.0
    %501 = vmatpush1.msra.mxu0 0.0
    %502 = vmatprep.subr.mxu0 0.0
    %503 = vmatpush1.msra.mxu0 0.0
    %504 = vmatprep.subr.mxu0 0.0
    %505 = vmatpush1.msra.mxu0 0.0
    %506 = vmatprep.subr.mxu0 0.0
    %507 = vmatpush1.msra.mxu0 0.0
    %508 = vmatprep.subr.mxu0 0.0
    %509 = vmatpush1.msra.mxu0 0.0
    %510 = vmatprep.subr.mxu0 0.0
    %511 = vmatpush1.msra.mxu0 0.0
    %512 = vmatprep.subr.mxu0 0.0
    %513 = vmatpush1.msra.mxu0 0.0
    %514 = vmatprep.subr.mxu0 0.0
    %515 = vmatpush1.msra.mxu0 0.0
    %516 = vmatprep.subr.mxu0 0.0
    %517 = vmatpush1.msra.mxu0 0.0
    %518 = vmatprep.subr.mxu0 0.0
    %519 = vmatpush1.msra.mxu0 0.0
    %520 = vmatprep.subr.mxu0 0.0
    %521 = vmatpush1.msra.mxu0 0.0
    %522 = vmatprep.subr.mxu0 0.0
    %523 = vmatpush1.msra.mxu0 0.0
    %524 = vmatprep.subr.mxu0 0.0
    %525 = vmatpush1.msra.mxu0 0.0
    %526 = vmatprep.subr.mxu0 0.0
    %527 = vmatpush1.msra.mxu0 0.0
    %528 = vmatprep.subr.mxu0 0.0
    %529 = vmatpush1.msra.mxu0 0.0
    %530 = vmatprep.subr.mxu0 0.0
    %531 = vmatpush1.msra.mxu0 0.0
    %532 = vmatprep.subr.mxu0 0.0
    %533 = vmatpush1.msra.mxu0 0.0
    %534 = vmatprep.subr.mxu0 0.0
    %535 = vmatpush1.msra.mxu0 0.0
    %536 = vmatprep.subr.mxu0 0.0
    %537 = vmatpush1.msra.mxu0 0.0
    %538 = vmatprep.subr.mxu0 0.0
    %539 = vmatpush1.msra.mxu0 0.0
    %540 = vmatprep.subr.mxu0 0.0
    %541 = vmatpush1.msra.mxu0 0.0
    %542 = vmatprep.subr.mxu0 0.0
    %543 = vmatpush1.msra.mxu0 0.0
    %544 = vmatprep.subr.mxu0 0.0
    %545 = vmatpush1.msra.mxu0 0.0
    %546 = vmatprep.mubr.f32.mxu0 0.0
    %547 = vmatmul.mubr.f32.gmra.mrb[0].mxu0 %v480
    %v548 = vpop.f32.mrb[0].mxu0
    %v549 = vadd.f32 0.0, %v548
    %v550 = vpop.f32.mrb[0].mxu0
    %551 = vdwg.mxu0
    %v553 = vsel %vm456, %v478, 0
    %555 = vmatprep.subr.mxu0 0.0
    %556 = vmatpush1.msra.mxu0 %v132
    %557 = vmatprep.subr.mxu0 0.0
    %558 = vmatpush1.msra.mxu0 0.0
    %559 = vmatprep.subr.mxu0 0.0
    %560 = vmatpush1.msra.mxu0 0.0
    %561 = vmatprep.subr.mxu0 0.0
    %562 = vmatpush1.msra.mxu0 0.0
    %563 = vmatprep.subr.mxu0 0.0
    %564 = vmatpush1.msra.mxu0 0.0
    %565 = vmatprep.subr.mxu0 0.0
    %566 = vmatpush1.msra.mxu0 0.0
    %567 = vmatprep.subr.mxu0 0.0
    %568 = vmatpush1.msra.mxu0 0.0
    %569 = vmatprep.subr.mxu0 0.0
    %570 = vmatpush1.msra.mxu0 0.0
    %571 = vmatprep.subr.mxu0 0.0
    %572 = vmatpush1.msra.mxu0 0.0
    %573 = vmatprep.subr.mxu0 0.0
    %574 = vmatpush1.msra.mxu0 0.0
    %575 = vmatprep.subr.mxu0 0.0
    %576 = vmatpush1.msra.mxu0 0.0
    %577 = vmatprep.subr.mxu0 0.0
    %578 = vmatpush1.msra.mxu0 0.0
    %579 = vmatprep.subr.mxu0 0.0
    %580 = vmatpush1.msra.mxu0 0.0
    %581 = vmatprep.subr.mxu0 0.0
    %582 = vmatpush1.msra.mxu0 0.0
    %583 = vmatprep.subr.mxu0 0.0
    %584 = vmatpush1.msra.mxu0 0.0
    %585 = vmatprep.subr.mxu0 0.0
    %586 = vmatpush1.msra.mxu0 0.0
    %587 = vmatprep.subr.mxu0 0.0
    %588 = vmatpush1.msra.mxu0 0.0
    %589 = vmatprep.subr.mxu0 0.0
    %590 = vmatpush1.msra.mxu0 0.0
    %591 = vmatprep.subr.mxu0 0.0
    %592 = vmatpush1.msra.mxu0 0.0
    %593 = vmatprep.subr.mxu0 0.0
    %594 = vmatpush1.msra.mxu0 0.0
    %595 = vmatprep.subr.mxu0 0.0
    %596 = vmatpush1.msra.mxu0 0.0
    %597 = vmatprep.subr.mxu0 0.0
    %598 = vmatpush1.msra.mxu0 0.0
    %599 = vmatprep.subr.mxu0 0.0
    %600 = vmatpush1.msra.mxu0 0.0
    %601 = vmatprep.subr.mxu0 0.0
    %602 = vmatpush1.msra.mxu0 0.0
    %603 = vmatprep.subr.mxu0 0.0
    %604 = vmatpush1.msra.mxu0 0.0
    %605 = vmatprep.subr.mxu0 0.0
    %606 = vmatpush1.msra.mxu0 0.0
    %607 = vmatprep.subr.mxu0 0.0
    %608 = vmatpush1.msra.mxu0 0.0
    %609 = vmatprep.subr.mxu0 0.0
    %610 = vmatpush1.msra.mxu0 0.0
    %611 = vmatprep.subr.mxu0 0.0
    %612 = vmatpush1.msra.mxu0 0.0
    %613 = vmatprep.subr.mxu0 0.0
    %614 = vmatpush1.msra.mxu0 0.0
    %615 = vmatprep.subr.mxu0 0.0
    %616 = vmatpush1.msra.mxu0 0.0
    %617 = vmatprep.subr.mxu0 0.0
    %618 = vmatpush1.msra.mxu0 0.0
    %619 = vmatprep.mubr.f32.mxu0 0.0
    %620 = vmatmul.mubr.f32.gmra.mrb[0].mxu0 %v553
    %v621 = vpop.f32.mrb[0].mxu0
    %v622 = vadd.f32 0.0, %v621
    %v623 = vpop.f32.mrb[0].mxu0
    %624 = vdwg.mxu0
    %625 = vrot.lane.b32.xlu0 %v259, 32
    %v626 = vpop.permute.xlu0 %625
    %627 = vrot.lane.b32.xlu0 %v291, 32
    %v628 = vpop.permute.xlu0 %627
    %v631 = vsel %vm250, %v549, %v626
    %v632 = vsel %vm250, %v622, %v628
    %v633 = vld [vmem:[%s7] sm:$0xff]
    %v634 = vld [vmem:[%s7 + $0x8] sm:$0xff]
    %v635 = vld [vmem:[%s7 + $0x10] sm:$0xff]
    %v636 = vld [vmem:[%s7 + $0x18] sm:$0xff]
    %v637 = vld [vmem:[%s7 + $0x20] sm:$0xff]
    %v638 = vld [vmem:[%s7 + $0x28] sm:$0xff]
    %v639 = vld [vmem:[%s7 + $0x30] sm:$0xff]
    %v640 = vld [vmem:[%s7 + $0x38] sm:$0xff]
    %v641 = vld [vmem:[%s8] sm:$0x1]
    %v643 = vlaneseq
    %v644 = vshrl.u32 %v643, 7
    %v645 = vsub.s32 0, %v644
    %v646 = vrot.slane %v641, %v645
    %vm648 = vcmask 523264
    %v650 = vsel %vm648, %v631, 0
    %v653 = vsel %vm648, %v632, 0
    %655 = vmatprep.subr.mxu0 0.0
    %656 = vmatpush1.msra.mxu0 %v633
    %657 = vmatprep.subr.mxu0 0.0
    %658 = vmatpush1.msra.mxu0 %v634
    %659 = vmatprep.subr.mxu0 0.0
    %660 = vmatpush1.msra.mxu0 %v635
    %661 = vmatprep.subr.mxu0 0.0
    %662 = vmatpush1.msra.mxu0 %v636
    %663 = vmatprep.subr.mxu0 0.0
    %664 = vmatpush1.msra.mxu0 %v637
    %665 = vmatprep.subr.mxu0 0.0
    %666 = vmatpush1.msra.mxu0 %v638
    %667 = vmatprep.subr.mxu0 0.0
    %668 = vmatpush1.msra.mxu0 %v639
    %669 = vmatprep.subr.mxu0 0.0
    %670 = vmatpush1.msra.mxu0 %v640
    %671 = vmatprep.subr.mxu0 0.0
    %672 = vmatpush1.msra.mxu0 0.0
    %673 = vmatprep.subr.mxu0 0.0
    %674 = vmatpush1.msra.mxu0 0.0
    %675 = vmatprep.subr.mxu0 0.0
    %676 = vmatpush1.msra.mxu0 0.0
    %677 = vmatprep.subr.mxu0 0.0
    %678 = vmatpush1.msra.mxu0 0.0
    %679 = vmatprep.subr.mxu0 0.0
    %680 = vmatpush1.msra.mxu0 0.0
    %681 = vmatprep.subr.mxu0 0.0
    %682 = vmatpush1.msra.mxu0 0.0
    %683 = vmatprep.subr.mxu0 0.0
    %684 = vmatpush1.msra.mxu0 0.0
    %685 = vmatprep.subr.mxu0 0.0
    %686 = vmatpush1.msra.mxu0 0.0
    %687 = vmatprep.subr.mxu0 0.0
    %688 = vmatpush1.msra.mxu0 0.0
    %689 = vmatprep.subr.mxu0 0.0
    %690 = vmatpush1.msra.mxu0 0.0
    %691 = vmatprep.subr.mxu0 0.0
    %692 = vmatpush1.msra.mxu0 0.0
    %693 = vmatprep.subr.mxu0 0.0
    %694 = vmatpush1.msra.mxu0 0.0
    %695 = vmatprep.subr.mxu0 0.0
    %696 = vmatpush1.msra.mxu0 0.0
    %697 = vmatprep.subr.mxu0 0.0
    %698 = vmatpush1.msra.mxu0 0.0
    %699 = vmatprep.subr.mxu0 0.0
    %700 = vmatpush1.msra.mxu0 0.0
    %701 = vmatprep.subr.mxu0 0.0
    %702 = vmatpush1.msra.mxu0 0.0
    %703 = vmatprep.subr.mxu0 0.0
    %704 = vmatpush1.msra.mxu0 0.0
    %705 = vmatprep.subr.mxu0 0.0
    %706 = vmatpush1.msra.mxu0 0.0
    %707 = vmatprep.subr.mxu0 0.0
    %708 = vmatpush1.msra.mxu0 0.0
    %709 = vmatprep.subr.mxu0 0.0
    %710 = vmatpush1.msra.mxu0 0.0
    %711 = vmatprep.subr.mxu0 0.0
    %712 = vmatpush1.msra.mxu0 0.0
    %713 = vmatprep.subr.mxu0 0.0
    %714 = vmatpush1.msra.mxu0 0.0
    %715 = vmatprep.subr.mxu0 0.0
    %716 = vmatpush1.msra.mxu0 0.0
    %717 = vmatprep.subr.mxu0 0.0
    %718 = vmatpush1.msra.mxu0 0.0
    %719 = vmatprep.mubr.f32.mxu0 0.0
    %720 = vmatmul.mubr.f32.gmra.mrb[0].mxu0 %v650
    %v721 = vpop.f32.mrb[0].mxu0
    %v722 = vadd.f32 %v646, %v721
    %v723 = vpop.f32.mrb[0].mxu0
    %724 = vmatprep.mubr.f32.mxu0 0.0
    %725 = vmatmul.mubr.f32.gmra.mrb[0].mxu0 %v653
    %v726 = vpop.f32.mrb[0].mxu0
    %v727 = vadd.f32 %v646, %v726
    %v728 = vpop.f32.mrb[0].mxu0
    %729 = vdwg.mxu0
    %v730 = vtanh.pop %v722
    %v731 = vtanh.pop %v727
    %732 = vst.msk [vmem:[#allocation2] sm:$0xff] %vm250, %v730
    %733 = vst.msk [vmem:[#allocation4] sm:$0xff] %vm456, %v477
    %735 = vrot.lane.b32.xlu0 %v731, 32
    %v736 = vpop.permute.xlu0 %735
    %vm738 = vcmask 523520
    %739 = vst.msk [vmem:[#allocation2] sm:$0xff] %vm738, %v736
    %740 = vrot.lane.b32.xlu0 %v478, 8
    %v741 = vpop.permute.xlu0 %740
    %vm743 = vcmask 130112
    %744 = vst.msk [vmem:[#allocation4] sm:$0xff] %vm743, %v741
    // Predicated region
    $region38: #{tpu_custom_call.1} parent=1 // pred_check
      _
    $region39: #{tpu_custom_call.1} parent=1 // pred_check_branch
      %746 = sbr.rel (0) target = $region41
    $region40: #{tpu_custom_call.1} parent=1 // pred_region
      %s748 = ssub.s32 128, 128
      %749 = vsyncadd [#allocation3], %s748
      %s751 = sshll.u32 [#allocation2], 4
      %s752 = int_to_ptr.vmem [resolvable:$true] %s751
      %754 = dma.vmem_to_hbm [thread:$0]  %s752, 128, %s9, [#allocation3]
    $region41: #{tpu_custom_call.1} parent=1 // pred_fallthru
      _
    // Predicated region
    $region42: #{tpu_custom_call.1} parent=1 // pred_check
      _
    $region43: #{tpu_custom_call.1} parent=1 // pred_check_branch
      %756 = sbr.rel (0) target = $region45
    $region44: #{tpu_custom_call.1} parent=1 // pred_region
      %s758 = ssub.s32 128, 128
      %759 = vsyncadd [#allocation5], %s758
      %s761 = sshll.u32 [#allocation4], 4
      %s762 = int_to_ptr.vmem [resolvable:$true] %s761
      %764 = dma.vmem_to_hbm [thread:$0]  %s762, 128, %s10, [#allocation5]
    $region45: #{tpu_custom_call.1} parent=1 // pred_fallthru
      _
    // Predicated region
    $region46: #{tpu_custom_call.1} parent=1 // pred_check
      _
    $region47: #{tpu_custom_call.1} parent=1 // pred_check_branch
      %766 = sbr.rel (0) target = $region49
    $region48: #{tpu_custom_call.1} parent=1 // pred_region
      %767 = dma.done [#allocation3], 128
    $region49: #{tpu_custom_call.1} parent=1 // pred_fallthru
      _
    // Predicated region
    $region50: #{tpu_custom_call.1} parent=1 // pred_check
      _
    $region51: #{tpu_custom_call.1} parent=1 // pred_check_branch
      %769 = sbr.rel (0) target = $region53
    $region52: #{tpu_custom_call.1} parent=1 // pred_region
      %770 = dma.done [#allocation5], 128
    $region53: #{tpu_custom_call.1} parent=1 // pred_fallthru
      _
    %771 = vsyncpa [#allocation3], 1
    %772 = vsyncpa [#allocation5], 1

</llo_original>
